<compile_context>
chip_gen: v5e
topology: v5e:2x2
jax: 0.10.0
libtpu: 0.0.40
codegen_flags: <defaults>
</compile_context>

<pallas_src>
import functools

import numpy as np
import jax
import jax.numpy as jnp
from jax.experimental import pallas as pl
from jax.experimental.pallas import tpu as pltpu


# ---------------------------------------------------------------------------
# helpers
# ---------------------------------------------------------------------------
def _round_up(v, m):
    return ((v + m - 1) // m) * m


def _detect_vmem_limit():
    # ~75% of the per-core VMEM, capped at 100 MiB: ~96 MiB on v5e/v6e
    # (128 MiB physical), ~48 MiB on v7x (64 MiB physical).
    try:
        info = pltpu.get_tpu_info()
        cap = getattr(info, "vmem_capacity_bytes", None)
        if cap:
            return int(min(cap * 3 // 4, 100 * 1024 * 1024))
    except Exception:
        pass
    return 48 * 1024 * 1024


_VMEM_LIMIT = _detect_vmem_limit()


def _pick_tile_m(m, cap=256):
    # bf16 packs [16,128] per vreg -> minimum sublane tile of 16.
    return int(min(cap, max(16, _round_up(int(m), 16))))


def _tn_cap(K):
    # Double-buffered bf16 weight block must fit in ~half the scoped VMEM.
    cap = (_VMEM_LIMIT // 2) // (2 * 2 * max(int(K), 1))
    cap = max(128, (cap // 128) * 128)
    return int(min(cap, 2048))


def _pick_group_tn(tn_total, cap):
    # Largest multiple-of-128 divisor of tn_total that is <= cap.
    units = tn_total // 128
    best = 1
    for d in range(1, units + 1):
        if units % d == 0 and d * 128 <= cap:
            best = d
    return best * 128


# ---------------------------------------------------------------------------
# Pallas kernels: fused matmul + bias; x cast f32->bf16 in-kernel, f32 acc/out
# ---------------------------------------------------------------------------
def _linear_kernel(x_ref, w_ref, b_ref, o_ref):
    # x_ref: (TM, K) f32   w_ref: (K, TN) bf16
    # b_ref: (1,  TN) f32  o_ref: (TM, TN) f32
    xb = x_ref[...].astype(jnp.bfloat16)
    acc = jnp.dot(xb, w_ref[...], preferred_element_type=jnp.float32)
    o_ref[...] = acc + b_ref[...]


def _grouped_linear_kernel(tb_ref, x_ref, w_ref, b_ref, o_ref):
    # tb_ref (SMEM scalar prefetch) is consumed only by the index_maps.
    del tb_ref
    xb = x_ref[...].astype(jnp.bfloat16)
    acc = jnp.dot(xb, w_ref[...], preferred_element_type=jnp.float32)
    o_ref[...] = acc + b_ref[...]


# ---------------------------------------------------------------------------
# Class decoder:  (Mp, K) @ (K, Np) + b
# Grid is (N-tiles, M-tiles): M innermost -> weight block index constant over
# consecutive steps, so Pallas skips its DMA; only the (small) x re-streams.
# ---------------------------------------------------------------------------
def pallas_class_linear(x, w, b, tm, tn):
    Mp, K = x.shape
    Kw, Np = w.shape
    assert K == Kw and Mp % tm == 0 and Np % tn == 0
    flops = 2 * Mp * K * Np
    bytes_accessed = Mp * K * 4 + K * Np * 2 + Np * 4 + Mp * Np * 4
    return pl.pallas_call(
        _linear_kernel,
        out_shape=jax.ShapeDtypeStruct((Mp, Np), jnp.float32),
        grid=(Np // tn, Mp // tm),
        in_specs=[
            pl.BlockSpec((tm, K), lambda j, i: (i, 0)),   # activation rows
            pl.BlockSpec((K, tn), lambda j, i: (0, j)),   # weight N-tile
            pl.BlockSpec((1, tn), lambda j, i: (0, j)),   # bias N-tile
        ],
        out_specs=pl.BlockSpec((tm, tn), lambda j, i: (i, j)),
        compiler_params=pltpu.CompilerParams(
            dimension_semantics=("parallel", "parallel"),
            vmem_limit_bytes=_VMEM_LIMIT),
        cost_estimate=pl.CostEstimate(flops=int(flops), transcendentals=0,
                                      bytes_accessed=int(bytes_accessed)),
    )(x, w, b)


# ---------------------------------------------------------------------------
# Grouped linear: one pallas_call for a bucket of per-class word decoders.
# tile_base[i] = class_id * n_col selects that class's weight/bias column
# block; an inner N-tile axis keeps the per-step weight block inside the VMEM
# budget (needed on v7x for wide class chunks).
# ---------------------------------------------------------------------------
def pallas_grouped_linear(tile_base, d_all, w_all, b_all, tm, tn, n_col):
    Rp, K = d_all.shape
    assert Rp % tm == 0
    n_row = Rp // tm
    tn_max = tn * n_col
    flops = 2 * Rp * K * tn_max
    bytes_accessed = Rp * K * 4 + n_row * n_col * K * tn * 2 + Rp * tn_max * 4
    grid_spec = pltpu.PrefetchScalarGridSpec(
        num_scalar_prefetch=1,
        grid=(n_col, n_row),                       # rows innermost: same-class
        in_specs=[                                 # runs reuse the weight block
            pl.BlockSpec((tm, K), lambda j, i, tb: (i, 0)),
            # TODO(synk): on v5e add pipeline_mode=pl.Buffered(3) here to hide
            # class-switch weight DMAs behind more compute.
            pl.BlockSpec((K, tn), lambda j, i, tb: (0, tb[i] + j)),
            pl.BlockSpec((1, tn), lambda j, i, tb: (0, tb[i] + j)),
        ],
        out_specs=pl.BlockSpec((tm, tn), lambda j, i, tb: (i, j)),
    )
    return pl.pallas_call(
        _grouped_linear_kernel,
        out_shape=jax.ShapeDtypeStruct((Rp, tn_max), jnp.float32),
        grid_spec=grid_spec,
        compiler_params=pltpu.CompilerParams(
            dimension_semantics=("parallel", "parallel"),
            vmem_limit_bytes=_VMEM_LIMIT),
        cost_estimate=pl.CostEstimate(flops=int(flops), transcendentals=0,
                                      bytes_accessed=int(bytes_accessed)),
    )(tile_base, d_all, w_all, b_all)


# ---------------------------------------------------------------------------
# jitted per-shape entry points (padding / gather fused under jit)
# ---------------------------------------------------------------------------
@functools.partial(jax.jit, static_argnames=("tm", "tn", "ncls"))
def _class_forward(x, w, b, *, tm, tn, ncls):
    M = x.shape[0]
    Mp = _round_up(M, tm)
    if Mp != M:                                   # pad only the M remainder
        x = jnp.pad(x, ((0, Mp - M), (0, 0)))
    out = pallas_class_linear(x, w, b, tm, tn)
    return out[:M, :ncls]


@functools.partial(jax.jit, static_argnames=("tm", "tn", "n_col"))
def _grouped_forward(x, row_idx, tile_base, w_all, b_all, *, tm, tn, n_col):
    # single gather builds the packed activation matrix (pad rows gather row 0
    # and are sliced away afterwards)
    d_all = jnp.take(x, row_idx, axis=0)
    return pallas_grouped_linear(tile_base, d_all, w_all, b_all, tm, tn, n_col)


# ---------------------------------------------------------------------------
# One-time parameter preparation (numpy packing, single device upload)
# ---------------------------------------------------------------------------
def prepare_decoder_params(nhid, cls_w, cls_b, word_ws, word_bs):
    """cls_w:(nhid,ncls), word_ws[c]:(nhid,chunk_c)  (already (in,out) layout)."""
    K = int(nhid)
    ncls = int(cls_w.shape[1])
    tn_cap = _tn_cap(K)

    cls_np_ = _round_up(ncls, 128)
    cls_tn = _pick_group_tn(cls_np_, tn_cap)
    cls_wp = np.zeros((K, cls_np_), np.float32)
    cls_wp[:, :ncls] = np.asarray(cls_w, np.float32)
    cls_bp = np.zeros((1, cls_np_), np.float32)
    cls_bp[0, :ncls] = np.asarray(cls_b, np.float32)

    chunks = [int(w.shape[1]) for w in word_ws]
    C = len(word_ws)
    tn_max = _round_up(max(chunks), 128)
    word_tn = _pick_group_tn(tn_max, tn_cap)
    # TODO(synk): with very skewed chunk widths, bucket classes into 2-3
    # width tiers (separate w_all slabs) to avoid streaming tn_max-wide
    # weight/output columns for narrow classes.
    w_all = np.zeros((K, C * tn_max), np.float32)
    b_all = np.zeros((1, C * tn_max), np.float32)
    for c in range(C):
        w_all[:, c * tn_max:c * tn_max + chunks[c]] = np.asarray(
            word_ws[c], np.float32)
        b_all[0, c * tn_max:c * tn_max + chunks[c]] = np.asarray(
            word_bs[c], np.float32)

    # TODO(synk): int8 weights + per-column dequant scales (v5e/v6e) or fp8
    # (v7x) would halve weight DMA, the binding resource at decoder batches.
    return dict(
        nhid=K, ncls=ncls, cls_tn=cls_tn,
        cls_w=jnp.asarray(cls_wp, dtype=jnp.bfloat16),
        cls_b=jnp.asarray(cls_bp, dtype=jnp.float32),
        chunks=chunks, tn_max=tn_max, word_tn=word_tn,
        word_ncol=tn_max // word_tn,
        word_w=jnp.asarray(w_all, dtype=jnp.bfloat16),
        word_b=jnp.asarray(b_all, dtype=jnp.float32))


# ---------------------------------------------------------------------------
# Host-side row packing for one bucket of classes (numpy, no device copies)
# ---------------------------------------------------------------------------
def _pack_bucket(classes, within_batch_idx, counts, tm, n_col):
    row_chunks, tile_base, offs = [], [], {}
    off = 0
    for c in classes:
        n = counts[c]
        pn = _round_up(n, tm)
        idx = np.zeros((pn,), np.int32)          # pad rows gather row 0
        idx[:n] = np.asarray(within_batch_idx[c], np.int32)
        row_chunks.append(idx)
        tile_base += [int(c) * n_col] * (pn // tm)
        offs[c] = (off, n)
        off += pn
    return (np.concatenate(row_chunks),
            np.asarray(tile_base, np.int32), offs)


# ---------------------------------------------------------------------------
# ClassBasedSMDecoder.forward equivalent
# ---------------------------------------------------------------------------
def class_based_sm_decoder_forward(x, params, within_batch_idx):
    """Mirrors ClassBasedSMDecoder.forward(input, within_batch_idx).

    x: (N, nhid) float32;  within_batch_idx: {class_id: int row indices}.
    Returns (p_class, p_words) like the torch module (f32 logits).
    """
    M, K = x.shape
    assert K == params["nhid"]

    # ----- class decoder: single tiled matmul over the whole batch ---------
    tm_cls = _pick_tile_m(M, cap=256)
    p_class = _class_forward(x, params["cls_w"], params["cls_b"],
                             tm=tm_cls, tn=params["cls_tn"],
                             ncls=params["ncls"])

    # ----- word decoders: grouped matmuls over all present classes ---------
    p_words = {}
    classes = list(within_batch_idx.keys())
    if not classes:
        return p_class, p_words

    counts = {c: int(len(within_batch_idx[c])) for c in classes}
    # descending row count -> longest same-class tile runs -> fewest weight DMAs
    classes.sort(key=lambda c: -counts[c])

    BIG = 64
    big = [c for c in classes if counts[c] >= BIG]
    small = [c for c in classes if counts[c] < BIG]
    buckets = []
    if big:
        buckets.append((big, _pick_tile_m(max(counts[c] for c in big), cap=256)))
    if small:
        buckets.append((small, _pick_tile_m(max(counts[c] for c in small), cap=32)))

    tn = params["word_tn"]
    n_col = params["word_ncol"]
    for bucket_classes, tm in buckets:
        row_idx, tile_base, offs = _pack_bucket(
            bucket_classes, within_batch_idx, counts, tm, n_col)
        out_all = _grouped_forward(
            x, jnp.asarray(row_idx), jnp.asarray(tile_base),
            params["word_w"], params["word_b"], tm=tm, tn=tn, n_col=n_col)
        for c in bucket_classes:
            off, n = offs[c]
            p_words[c] = out_all[off:off + n, :params["chunks"][int(c)]]
    return p_class, p_words


# ---------------------------------------------------------------------------
# build_labels equivalent (pure host glue producing the index dicts)
# ---------------------------------------------------------------------------
def build_within_batch_idx(target, word2cls):
    counts = {}
    within_cls_idx_of_word = []
    for w, c in enumerate(word2cls):
        within_cls_idx_of_word.append(counts.get(c, 0))
        counts[c] = counts.get(c, 0) + 1
    within_batch_idx = {}
    within_cls_idx_dic = {}
    for i, t in enumerate(target):
        c = word2cls[t]
        within_batch_idx.setdefault(c, []).append(i)
        within_cls_idx_dic.setdefault(c, []).append(within_cls_idx_of_word[t])
    within_batch_idx = {c: np.asarray(v, np.int32)
                        for c, v in within_batch_idx.items()}
    within_cls_idx_dic = {c: np.asarray(v, np.int32)
                          for c, v in within_cls_idx_dic.items()}
    return within_batch_idx, within_cls_idx_dic


if __name__ == "__main__":
    key = jax.random.PRNGKey(0)

    # small, module-consistent shapes
    nhid = 32
    ncls = 4
    class_chunks = [5, 6, 4, 3]                       # vocab of 18 words
    word2cls = [0] * 5 + [1] * 6 + [2] * 4 + [3] * 3  # word -> class id
    batch = 8                                          # flattened rnn rows

    keys = jax.random.split(key, 3 + len(class_chunks))
    x = jax.random.normal(keys[0], (batch, nhid), jnp.float32)

    # deterministic params: uniform(-0.1, 0.1) weights, zero biases
    r = 0.1
    cls_w = jax.random.uniform(keys[1], (nhid, ncls), jnp.float32, -r, r)
    cls_b = jnp.zeros((ncls,), jnp.float32)
    word_ws = [jax.random.uniform(keys[2 + c], (nhid, class_chunks[c]),
                                  jnp.float32, -r, r)
               for c in range(len(class_chunks))]
    word_bs = [jnp.zeros((class_chunks[c],), jnp.float32)
               for c in range(len(class_chunks))]

    # pad / cast parameters once (hoisted out of the per-call path)
    params = prepare_decoder_params(nhid, cls_w, cls_b, word_ws, word_bs)

    # a small target sequence -> within_batch_idx dict (build_labels glue)
    target = [0, 6, 12, 16, 3, 7, 13, 1]
    within_batch_idx, _ = build_within_batch_idx(target, word2cls)

    # run the Pallas-backed forward
    p_class, p_words = class_based_sm_decoder_forward(
        x, params, within_batch_idx)
    jax.block_until_ready(p_class)
    for c in p_words:
        jax.block_until_ready(p_words[c])

    # reference: same bf16 rounding of x/W inside the kernels, f32 accumulate
    xq = x.astype(jnp.bfloat16).astype(jnp.float32)
    ref_class = xq @ cls_w.astype(jnp.bfloat16).astype(jnp.float32) + cls_b
    assert jnp.allclose(p_class, ref_class, atol=1e-3), "class decoder mismatch"
    for c in within_batch_idx:
        d = jnp.take(xq, jnp.asarray(within_batch_idx[c]), axis=0)
        wq = word_ws[int(c)].astype(jnp.bfloat16).astype(jnp.float32)
        ref_w = d @ wq + word_bs[int(c)]
        assert jnp.allclose(p_words[c], ref_w, atol=1e-3), \
            f"word decoder {c} mismatch"

    # TODO(synk): CrossEntropyLoss in forward_with_loss is host-side glue over
    # these logits (not part of the forward hot path); not implemented here.
    print("KERNEL_OK")
</pallas_src>

<mosaic_0001>
module attributes {stable_mosaic.version = 11 : i64} {
  func.func @_linear_kernel(%arg0: i32, %arg1: i32, %arg2: memref<16x32xf32, #tpu.memory_space<vmem>>, %arg3: memref<32x128xbf16, #tpu.memory_space<vmem>>, %arg4: memref<1x128xf32, #tpu.memory_space<vmem>>, %arg5: memref<16x128xf32, #tpu.memory_space<vmem>>) attributes {dimension_semantics = [#tpu.dimension_semantics<parallel>, #tpu.dimension_semantics<parallel>], iteration_bounds = array<i64: 1, 1>, scalar_prefetch = 0 : i64, scratch_operands = 0 : i64, tpu.core_type = #tpu.core_type<tc>, window_params = [{transform_indices = @transform_0, window_bounds = array<i64: 16, 32>}, {transform_indices = @transform_1, window_bounds = array<i64: 32, 128>}, {transform_indices = @transform_2, window_bounds = array<i64: 1, 128>}, {transform_indices = @transform_3, window_bounds = array<i64: 16, 128>}]} {
    %c0 = arith.constant 0 : index
    %c0_0 = arith.constant 0 : index
    %0 = vector.load %arg2[%c0, %c0_0] : memref<16x32xf32, #tpu.memory_space<vmem>>, vector<16x32xf32>
    %1 = arith.truncf %0 : vector<16x32xf32> to vector<16x32xbf16>
    %c0_1 = arith.constant 0 : index
    %c0_2 = arith.constant 0 : index
    %2 = vector.load %arg3[%c0_1, %c0_2] : memref<32x128xbf16, #tpu.memory_space<vmem>>, vector<32x128xbf16>
    %cst = arith.constant dense<0.000000e+00> : vector<16x128xf32>
    %3 = tpu.matmul %1, %2, %cst {dimension_numbers = #tpu.dot_dimension_numbers<[1], [0], [0], [1], [0, 0, 1, 1], [], []>} : vector<16x32xbf16>, vector<32x128xbf16>, vector<16x128xf32> -> vector<16x128xf32>
    %c0_3 = arith.constant 0 : index
    %c0_4 = arith.constant 0 : index
    %4 = vector.load %arg4[%c0_3, %c0_4] : memref<1x128xf32, #tpu.memory_space<vmem>>, vector<1x128xf32>
    %5 = vector.broadcast %4 : vector<1x128xf32> to vector<16x128xf32>
    %6 = arith.addf %3, %5 : vector<16x128xf32>
    %c0_5 = arith.constant 0 : index
    %c0_6 = arith.constant 0 : index
    %7 = vector.load %arg5[%c0_5, %c0_6] : memref<16x128xf32, #tpu.memory_space<vmem>>, vector<16x128xf32>
    tpu.vector_store %arg5[%c0_5, %c0_6], %6 {strides = array<i32>} : memref<16x128xf32, #tpu.memory_space<vmem>>, vector<16x128xf32>,
    return
  }
  func.func @transform_0(%arg0: i32, %arg1: i32) -> (i32, i32) {
    %c0_i32 = arith.constant 0 : i32
    %c0_i32_0 = arith.constant 0 : i32
    return %arg1, %c0_i32 : i32, i32
  }
  func.func @transform_1(%arg0: i32, %arg1: i32) -> (i32, i32) {
    %c0_i32 = arith.constant 0 : i32
    %c0_i32_0 = arith.constant 0 : i32
    return %c0_i32, %arg0 : i32, i32
  }
  func.func @transform_2(%arg0: i32, %arg1: i32) -> (i32, i32) {
    %c0_i32 = arith.constant 0 : i32
    %c0_i32_0 = arith.constant 0 : i32
    return %c0_i32, %arg0 : i32, i32
  }
  func.func @transform_3(%arg0: i32, %arg1: i32) -> (i32, i32) {
    %c0_i32 = arith.constant 0 : i32
    return %arg1, %arg0 : i32, i32
  }
}

</mosaic_0001>

<llo_original>
// kernel: _class_forward.1
$region0: #{_class_forward.1}
  #allocation0 [shape = 'u32[]', space=smem, size = 0x4, offset = 0x4, fixed_abs, tag = 'smem constant byte address 0x4 - core index']
  #allocation1 [shape = 'u32[72,128]{1,0:T(1,128)}', space=vmem, size = 0x9000, scoped, tag = 'internal scratch']
  %s0 = inlined_call_operand.vmem [shape: f32[16,32], index: 0, kind: input, shape index: {}]
  %s1 = inlined_call_operand.vmem [shape: bf16[32,128], index: 1, kind: input, shape index: {}]
  %s2 = inlined_call_operand.vmem [shape: f32[1,128], index: 2, kind: input, shape index: {}]
  %s3 = inlined_call_operand.vmem [shape: f32[16,128], index: 3, kind: output, shape index: {}]
  %s4 = sld [smem:[#allocation0]]
  $region22: #{_class_forward.1} parent=0
    _
  %s6 = ssub.s32 1, %s4
  %s7 = scalar_select 0, %s6, %s4
  // Predicated region
  $region2: #{_class_forward.1} parent=0 // pred_check
    _
  $region3: #{_class_forward.1} parent=0 // pred_check_branch
    %9 = sbr.rel (0) target = $region5
  $region4: #{_class_forward.1} parent=0 // pred_region
    _
  $region5: #{_class_forward.1} parent=0 // pred_fallthru
    _
  // Predicated region
  $region6: #{_class_forward.1} parent=0 // pred_check
    _
  $region7: #{_class_forward.1} parent=0 // pred_check_branch
    %11 = sbr.rel (0) target = $region9
  $region8: #{_class_forward.1} parent=0 // pred_region
    _
  $region9: #{_class_forward.1} parent=0 // pred_fallthru
    _
  // Predicated region
  $region10: #{_class_forward.1} parent=0 // pred_check
    _
  $region11: #{_class_forward.1} parent=0 // pred_check_branch
    %13 = sbr.rel (0) target = $region13
  $region12: #{_class_forward.1} parent=0 // pred_region
    _
  $region13: #{_class_forward.1} parent=0 // pred_fallthru
    _
  %v15 = vld [vmem:[%s0] sm:$0xff]
  %v16 = vld [vmem:[%s0 + $0x8] sm:$0xff]
  %v17 = vpack.c.bf16 %v16, %v15
  %v18 = vld [vmem:[%s1] sm:$0xf]
  %v19 = vld [vmem:[%s1 + $0x4] sm:$0xf]
  %v20 = vld [vmem:[%s1 + $0x8] sm:$0xf]
  %v21 = vld [vmem:[%s1 + $0xc] sm:$0xf]
  %v22 = vld [vmem:[%s2] sm:$0x1]
  %v24 = vperm.slane %v22, 0
  %v30 = vunpack.c.l.b16 %v18
  %v31 = vunpack.c.l.b16 %v19
  %v32 = vunpack.c.l.b16 %v20
  %v33 = vunpack.c.l.b16 %v21
  %v34 = vpack.c.b16 %v31, %v30
  %v35 = vpack.c.b16 %v33, %v32
  %vm38 = vcmask 261120
  %v40 = vsel %vm38, %v17, 0
  %42 = vmatpush.bf16.msra.mxu0 0
  %43 = vmatpush.bf16.msra.mxu0 0
  %44 = vmatpush.bf16.msra.mxu0 0
  %45 = vmatpush.bf16.msra.mxu0 0
  %46 = vmatpush.bf16.msra.mxu0 0
  %47 = vmatpush.bf16.msra.mxu0 0
  %48 = vmatpush.bf16.msra.mxu0 %v35
  %49 = vmatpush.bf16.msra.mxu0 %v34
  %50 = vmatmul.bf16.gmra.mxu0 %v40
  %v51 = vpop.f32.mrf.mxu0
  %v52 = vadd.f32 %v24, %v51
  %v53 = vpop.f32.mrf.mxu0
  %v54 = vadd.f32 %v24, %v53
  %55 = vdwg.mxu0
  %56 = vst [vmem:[%s3] sm:$0xff] %v52
  %57 = vst [vmem:[%s3 + $0x8] sm:$0xff] %v54
  // Predicated region
  $region14: #{_class_forward.1} parent=0 // pred_check
    _
  $region15: #{_class_forward.1} parent=0 // pred_check_branch
    %59 = sbr.rel (0) target = $region17
  $region16: #{_class_forward.1} parent=0 // pred_region
    _
  $region17: #{_class_forward.1} parent=0 // pred_fallthru
    _
  // Predicated region
  $region18: #{_class_forward.1} parent=0 // pred_check
    _
  $region19: #{_class_forward.1} parent=0 // pred_check_branch
    %61 = sbr.rel (0) target = $region21
  $region20: #{_class_forward.1} parent=0 // pred_region
    _
  $region21: #{_class_forward.1} parent=0 // pred_fallthru
    _

</llo_original>
